<compile_context>
chip_gen: v7x
topology: tpu7x:2x2x1
jax: 0.10.0
libtpu: 0.0.40
codegen_flags: <defaults>
</compile_context>

<pallas_src>
import jax
import jax.numpy as jnp
from jax.experimental import pallas as pl
from jax.experimental.pallas import tpu as pltpu

EPS = 1e-5


def add_layernorm_kernel(x_ref, y_ref, g_ref, b_ref, o_ref):
    # x_ref, y_ref, o_ref: (TR, C) tiles; g_ref, b_ref: (1, C) resident.
    c = x_ref.shape[-1]
    inv_c = jnp.float32(1.0 / c)

    s = x_ref[...].astype(jnp.float32) + y_ref[...].astype(jnp.float32)

    # One-pass stats: the two reductions are independent -> overlap on XLU.
    sum_s = jnp.sum(s, axis=-1, keepdims=True)
    sum_sq = jnp.sum(s * s, axis=-1, keepdims=True)
    mean = sum_s * inv_c
    var = sum_sq * inv_c - mean * mean          # biased var (PyTorch LN)
    inv = jax.lax.rsqrt(var + jnp.float32(EPS))

    scale = g_ref[...].astype(jnp.float32)
    shift = b_ref[...].astype(jnp.float32)
    # Reuse `s` as the centered value to keep live intermediates low.
    s = (s - mean) * inv
    o_ref[...] = (s * scale + shift).astype(o_ref.dtype)


def add_layernorm(x448, x455, gamma, beta, *, tr=64):
    assert x448.shape == x455.shape
    orig_shape = x448.shape
    C = orig_shape[-1]
    rows = 1
    for d in orig_shape[:-1]:
        rows *= d

    x2 = x448.reshape(rows, C)
    y2 = x455.reshape(rows, C)
    g2 = gamma.reshape(1, C)
    b2 = beta.reshape(1, C)

    # Pad rows up to a multiple of the row tile so every block is full /
    # unmasked (padded rows are zeros; var+eps > 0 so no NaNs, and they are
    # sliced off afterwards).
    rows_p = pl.cdiv(rows, tr) * tr
    if rows_p != rows:
        pad = rows_p - rows
        x2 = jnp.pad(x2, ((0, pad), (0, 0)))
        y2 = jnp.pad(y2, ((0, pad), (0, 0)))

    grid = (rows_p // tr,)

    out = pl.pallas_call(
        add_layernorm_kernel,
        out_shape=jax.ShapeDtypeStruct((rows_p, C), x448.dtype),
        grid_spec=pl.GridSpec(
            grid=grid,
            in_specs=[
                pl.BlockSpec((tr, C), lambda i: (i, 0)),
                pl.BlockSpec((tr, C), lambda i: (i, 0)),
                pl.BlockSpec((1, C), lambda i: (0, 0)),
                pl.BlockSpec((1, C), lambda i: (0, 0)),
            ],
            out_specs=pl.BlockSpec((tr, C), lambda i: (i, 0)),
        ),
        compiler_params=pltpu.CompilerParams(
            dimension_semantics=("parallel",),
        ),
    )(x2, y2, g2, b2)

    if rows_p != rows:
        out = out[:rows]
    return out.reshape(orig_shape)


if __name__ == "__main__":
    key = jax.random.PRNGKey(0)
    k1, k2 = jax.random.split(key)

    # Shapes implied by the module's forward: [1, 14, 14, 512]
    B, H, W, C = 1, 14, 14, 512
    x448 = jax.random.normal(k1, (B, H, W, C), dtype=jnp.float32)
    x455 = jax.random.normal(k2, (B, H, W, C), dtype=jnp.float32)

    # LayerNorm(512, elementwise_affine=True) default init: weight=1, bias=0
    gamma = jnp.ones((C,), dtype=jnp.float32)
    beta = jnp.zeros((C,), dtype=jnp.float32)

    out = add_layernorm(x448, x455, gamma, beta)
    out = jax.block_until_ready(out)

    # Reference check against plain JAX (two-pass, matches PyTorch LN)
    s = x448 + x455
    mean = jnp.mean(s, axis=-1, keepdims=True)
    var = jnp.mean((s - mean) ** 2, axis=-1, keepdims=True)
    ref = (s - mean) / jnp.sqrt(var + EPS) * gamma + beta
    assert jnp.allclose(out, ref, atol=1e-4, rtol=1e-4), "mismatch vs reference"

    print("KERNEL_OK")
</pallas_src>

<mosaic_0001>
module attributes {stable_mosaic.version = 11 : i64} {
  func.func @add_layernorm_kernel(%arg0: i32, %arg1: memref<64x512xf32, #tpu.memory_space<vmem>>, %arg2: memref<64x512xf32, #tpu.memory_space<vmem>>, %arg3: memref<1x512xf32, #tpu.memory_space<vmem>>, %arg4: memref<1x512xf32, #tpu.memory_space<vmem>>, %arg5: memref<64x512xf32, #tpu.memory_space<vmem>>) attributes {dimension_semantics = [#tpu.dimension_semantics<parallel>], iteration_bounds = array<i64: 4>, scalar_prefetch = 0 : i64, scratch_operands = 0 : i64, tpu.core_type = #tpu.core_type<tc>, window_params = [{transform_indices = @transform_0, window_bounds = array<i64: 64, 512>}, {transform_indices = @transform_1, window_bounds = array<i64: 64, 512>}, {pipeline_mode = #tpu.pipeline_mode<synchronous>, transform_indices = @transform_2, window_bounds = array<i64: 1, 512>}, {pipeline_mode = #tpu.pipeline_mode<synchronous>, transform_indices = @transform_3, window_bounds = array<i64: 1, 512>}, {transform_indices = @transform_4, window_bounds = array<i64: 64, 512>}]} {
    %c0 = arith.constant 0 : index
    %c0_0 = arith.constant 0 : index
    %0 = vector.load %arg1[%c0, %c0_0] : memref<64x512xf32, #tpu.memory_space<vmem>>, vector<64x512xf32>
    %c0_1 = arith.constant 0 : index
    %c0_2 = arith.constant 0 : index
    %1 = vector.load %arg2[%c0_1, %c0_2] : memref<64x512xf32, #tpu.memory_space<vmem>>, vector<64x512xf32>
    %2 = arith.addf %0, %1 : vector<64x512xf32>
    %cst = arith.constant dense<0.000000e+00> : vector<64xf32>
    %3 = vector.multi_reduction <add>, %2, %cst [1] : vector<64x512xf32> to vector<64xf32>
    %4 = vector.shape_cast %3 : vector<64xf32> to vector<64x1xf32>
    %5 = arith.mulf %2, %2 : vector<64x512xf32>
    %cst_3 = arith.constant dense<0.000000e+00> : vector<64xf32>
    %6 = vector.multi_reduction <add>, %5, %cst_3 [1] : vector<64x512xf32> to vector<64xf32>
    %7 = vector.shape_cast %6 : vector<64xf32> to vector<64x1xf32>
    %cst_4 = arith.constant 0.001953125 : f32
    %8 = vector.broadcast %cst_4 : f32 to vector<64x1xf32>
    %9 = arith.mulf %4, %8 : vector<64x1xf32>
    %cst_5 = arith.constant 0.001953125 : f32
    %10 = vector.broadcast %cst_5 : f32 to vector<64x1xf32>
    %11 = arith.mulf %7, %10 : vector<64x1xf32>
    %12 = arith.mulf %9, %9 : vector<64x1xf32>
    %13 = arith.subf %11, %12 : vector<64x1xf32>
    %cst_6 = arith.constant 9.99999974E-6 : f32
    %14 = vector.broadcast %cst_6 : f32 to vector<64x1xf32>
    %15 = arith.addf %13, %14 : vector<64x1xf32>
    %16 = math.rsqrt %15 : vector<64x1xf32>
    %c0_7 = arith.constant 0 : index
    %c0_8 = arith.constant 0 : index
    %17 = vector.load %arg3[%c0_7, %c0_8] : memref<1x512xf32, #tpu.memory_space<vmem>>, vector<1x512xf32>
    %c0_9 = arith.constant 0 : index
    %c0_10 = arith.constant 0 : index
    %18 = vector.load %arg4[%c0_9, %c0_10] : memref<1x512xf32, #tpu.memory_space<vmem>>, vector<1x512xf32>
    %19 = vector.broadcast %9 : vector<64x1xf32> to vector<64x512xf32>
    %20 = arith.subf %2, %19 : vector<64x512xf32>
    %21 = vector.broadcast %16 : vector<64x1xf32> to vector<64x512xf32>
    %22 = arith.mulf %20, %21 : vector<64x512xf32>
    %23 = vector.broadcast %17 : vector<1x512xf32> to vector<64x512xf32>
    %24 = arith.mulf %22, %23 : vector<64x512xf32>
    %25 = vector.broadcast %18 : vector<1x512xf32> to vector<64x512xf32>
    %26 = arith.addf %24, %25 : vector<64x512xf32>
    %c0_11 = arith.constant 0 : index
    %c0_12 = arith.constant 0 : index
    %27 = vector.load %arg5[%c0_11, %c0_12] : memref<64x512xf32, #tpu.memory_space<vmem>>, vector<64x512xf32>
    tpu.vector_store %arg5[%c0_11, %c0_12], %26 {strides = array<i32>} : memref<64x512xf32, #tpu.memory_space<vmem>>, vector<64x512xf32>,
    return
  }
  func.func @transform_0(%arg0: i32) -> (i32, i32) {
    %c0_i32 = arith.constant 0 : i32
    %c0_i32_0 = arith.constant 0 : i32
    return %arg0, %c0_i32 : i32, i32
  }
  func.func @transform_1(%arg0: i32) -> (i32, i32) {
    %c0_i32 = arith.constant 0 : i32
    %c0_i32_0 = arith.constant 0 : i32
    return %arg0, %c0_i32 : i32, i32
  }
  func.func @transform_2(%arg0: i32) -> (i32, i32) {
    %c0_i32 = arith.constant 0 : i32
    %c0_i32_0 = arith.constant 0 : i32
    %c0_i32_1 = arith.constant 0 : i32
    return %c0_i32, %c0_i32_0 : i32, i32
  }
  func.func @transform_3(%arg0: i32) -> (i32, i32) {
    %c0_i32 = arith.constant 0 : i32
    %c0_i32_0 = arith.constant 0 : i32
    %c0_i32_1 = arith.constant 0 : i32
    return %c0_i32, %c0_i32_0 : i32, i32
  }
  func.func @transform_4(%arg0: i32) -> (i32, i32) {
    %c0_i32 = arith.constant 0 : i32
    %c0_i32_0 = arith.constant 0 : i32
    return %arg0, %c0_i32 : i32, i32
  }
}

</mosaic_0001>

<llo_original>
// kernel: tpu_custom_call.1
$region0: #{tpu_custom_call.1}
  #allocation0 [shape = 'u32[]', space=smem, size = 0x4, offset = 0x4, fixed_abs, tag = 'smem constant byte address 0x4 - core index']
  #allocation1 [shape = 'u32[144,128]{1,0:T(1,128)}', space=vmem, size = 0x12000, scoped, tag = 'internal scratch']
  %s0 = inlined_call_operand.hbm [shape: f32[256,512], index: 0, kind: input, shape index: {}]
  %s1 = inlined_call_operand.hbm [shape: f32[256,512], index: 1, kind: input, shape index: {}]
  %s2 = inlined_call_operand.vmem [shape: f32[1,512], index: 2, kind: input, shape index: {}]
  %s3 = inlined_call_operand.vmem [shape: f32[1,512], index: 3, kind: input, shape index: {}]
  %s4 = inlined_call_operand.hbm [shape: f32[256,512], index: 4, kind: output, shape index: {}]
  %s5 = sld [smem:[#allocation0]]
  $region57: #{tpu_custom_call.1} parent=0
    _
  %s7 = ssub.s32 1, %s5
  %s8 = scalar_select 0, %s7, %s5
  $region1: #{tpu_custom_call.1} parent=0
    #allocation2 [shape = 'u8[262144]{0}', space=vmem, size = 0x40000, scoped, tag = 'input window, operand 0']
    #allocation3 [shape = 's32[2]{0}', space=sflag, size = 0x8, scoped, tag = 'scoped memory for tpu_custom_call.1']
    #allocation4 [shape = 's32[2]{0}', space=sflag, size = 0x8, scoped, tag = 'scoped memory for tpu_custom_call.1']
    #allocation5 [shape = 'u8[262144]{0}', space=vmem, size = 0x40000, scoped, tag = 'input window, operand 1']
    #allocation6 [shape = 's32[2]{0}', space=sflag, size = 0x8, scoped, tag = 'scoped memory for tpu_custom_call.1']
    #allocation7 [shape = 'u8[262144]{0}', space=vmem, size = 0x40000, scoped, tag = 'output window, operand 0']
    %9 = vsyncpa [#allocation3], 0
    %s10 = scalar_lea.sflag [#allocation3], 1
    %11 = vsyncpa %s10, 0
    %12 = vsyncpa [#allocation6], 0
    %s13 = scalar_lea.sflag [#allocation6], 1
    %14 = vsyncpa %s13, 0
    %15 = vsyncpa [#allocation4], 0
    %s16 = scalar_lea.sflag [#allocation4], 1
    %17 = vsyncpa %s16, 0
    loop: start=0, step=1, limit=6
    $region2: #{tpu_custom_call.1} parent=1 // loop_pre_header
      _
    $region3: #{tpu_custom_call.1} parent=1 // loop_header
      %s19 = sphi 0, %s23
      %p20 = scmp.ge.s32.totalorder %s19, 6
      %s29 = sphi 0, %s31
      %s32 = sphi 0, %s29
      %s33 = sphi 0, %s32
      %s49 = sphi 0, %s33
      %s55 = sphi 0, %s57
      %s58 = sphi 0, %s55
      %s59 = sphi 0, %s58
      %s75 = sphi 0, %s59
      %s79 = sphi 0, %s79
      %s81 = sphi 0, %s79
      %s82 = sphi 0, %s81
      %s96 = sphi 0, %s82
      %s100 = sphi 0, %s100
      %s102 = sphi 0, %s100
      %s103 = sphi 0, %s102
      %s117 = sphi 0, %s103
      %s123 = sphi 0, %s125
      %s126 = sphi 0, %s123
      %s127 = sphi 0, %s126
      %s143 = sphi 0, %s127
    $region4: #{tpu_custom_call.1} parent=1 // loop_header_branch
      %22 = sbr.rel (%p20) target = $region8
    $region5: #{tpu_custom_call.1} parent=1 // loop_body
      %s24 = ssub.s32 %s19, 1
      %s25 = ssub.s32 %s19, 2
      %s26 = sadd.s32 %s19, 1
      %s27 = ssub.s32 %s19, %s26
      %p28 = scmp.eq.s32.totalorder %s27, 0
      %s30 = sadd.s32 %s29, 1
      %s31 = scalar_select %p28, %s29, %s30
      %p34 = pneg %p28
      %p35 = scmp.eq.s32.totalorder %s19, 3
      %p36 = por %p34, %p35
      %p37 = scmp.ne.s32.totalorder %s29, %s32
      %p38 = scmp.eq.s32.totalorder %s19, 0
      %p39 = por %p37, %p38
      %p40 = scmp.ne.s32.totalorder %s29, %s32
      %p41 = scmp.eq.s32.totalorder %s24, 3
      %p42 = por %p40, %p41
      %p43 = scmp.ne.s32.totalorder %s32, %s33
      %p44 = scmp.eq.s32.totalorder %s24, 0
      %p45 = por %p43, %p44
      %p46 = scmp.ne.s32.totalorder %s32, %s33
      %p47 = scmp.eq.s32.totalorder %s25, 3
      %p48 = por %p46, %p47
      %p50 = scmp.ne.s32.totalorder %s33, %s49
      %p51 = scmp.eq.s32.totalorder %s25, 0
      %p52 = por %p50, %p51
      %s53 = ssub.s32 %s19, %s26
      %p54 = scmp.eq.s32.totalorder %s53, 0
      %s56 = sadd.s32 %s55, 1
      %s57 = scalar_select %p54, %s55, %s56
      %p60 = pneg %p54
      %p61 = scmp.eq.s32.totalorder %s19, 3
      %p62 = por %p60, %p61
      %p63 = scmp.ne.s32.totalorder %s55, %s58
      %p64 = scmp.eq.s32.totalorder %s19, 0
      %p65 = por %p63, %p64
      %p66 = scmp.ne.s32.totalorder %s55, %s58
      %p67 = scmp.eq.s32.totalorder %s24, 3
      %p68 = por %p66, %p67
      %p69 = scmp.ne.s32.totalorder %s58, %s59
      %p70 = scmp.eq.s32.totalorder %s24, 0
      %p71 = por %p69, %p70
      %p72 = scmp.ne.s32.totalorder %s58, %s59
      %p73 = scmp.eq.s32.totalorder %s25, 3
      %p74 = por %p72, %p73
      %p76 = scmp.ne.s32.totalorder %s59, %s75
      %p77 = scmp.eq.s32.totalorder %s25, 0
      %p78 = por %p76, %p77
      %s80 = sadd.s32 %s79, 1
      %p83 = scmp.eq.s32.totalorder %s19, 3
      %p84 = scmp.ne.s32.totalorder %s79, %s81
      %p85 = scmp.eq.s32.totalorder %s19, 0
      %p86 = por %p84, %p85
      %p87 = scmp.ne.s32.totalorder %s79, %s81
      %p88 = scmp.eq.s32.totalorder %s24, 3
      %p89 = por %p87, %p88
      %p90 = scmp.ne.s32.totalorder %s81, %s82
      %p91 = scmp.eq.s32.totalorder %s24, 0
      %p92 = por %p90, %p91
      %p93 = scmp.ne.s32.totalorder %s81, %s82
      %p94 = scmp.eq.s32.totalorder %s25, 3
      %p95 = por %p93, %p94
      %p97 = scmp.ne.s32.totalorder %s82, %s96
      %p98 = scmp.eq.s32.totalorder %s25, 0
      %p99 = por %p97, %p98
      %s101 = sadd.s32 %s100, 1
      %p104 = scmp.eq.s32.totalorder %s19, 3
      %p105 = scmp.ne.s32.totalorder %s100, %s102
      %p106 = scmp.eq.s32.totalorder %s19, 0
      %p107 = por %p105, %p106
      %p108 = scmp.ne.s32.totalorder %s100, %s102
      %p109 = scmp.eq.s32.totalorder %s24, 3
      %p110 = por %p108, %p109
      %p111 = scmp.ne.s32.totalorder %s102, %s103
      %p112 = scmp.eq.s32.totalorder %s24, 0
      %p113 = por %p111, %p112
      %p114 = scmp.ne.s32.totalorder %s102, %s103
      %p115 = scmp.eq.s32.totalorder %s25, 3
      %p116 = por %p114, %p115
      %p118 = scmp.ne.s32.totalorder %s103, %s117
      %p119 = scmp.eq.s32.totalorder %s25, 0
      %p120 = por %p118, %p119
      %s121 = ssub.s32 %s19, %s26
      %p122 = scmp.eq.s32.totalorder %s121, 0
      %s124 = sadd.s32 %s123, 1
      %s125 = scalar_select %p122, %s123, %s124
      %p128 = pneg %p122
      %p129 = scmp.eq.s32.totalorder %s19, 3
      %p130 = por %p128, %p129
      %p131 = scmp.ne.s32.totalorder %s123, %s126
      %p132 = scmp.eq.s32.totalorder %s19, 0
      %p133 = por %p131, %p132
      %p134 = scmp.ne.s32.totalorder %s123, %s126
      %p135 = scmp.eq.s32.totalorder %s24, 3
      %p136 = por %p134, %p135
      %p137 = scmp.ne.s32.totalorder %s126, %s127
      %p138 = scmp.eq.s32.totalorder %s24, 0
      %p139 = por %p137, %p138
      %p140 = scmp.ne.s32.totalorder %s126, %s127
      %p141 = scmp.eq.s32.totalorder %s25, 3
      %p142 = por %p140, %p141
      %p144 = scmp.ne.s32.totalorder %s127, %s143
      %p145 = scmp.eq.s32.totalorder %s25, 0
      %p146 = por %p144, %p145
      %p147 = scmp.le.s32.totalorder 1, %s19
      %p148 = scmp.lt.s32.totalorder %s19, 5
      %p149 = pnand %p147, %p148
      %p150 = pneg %p149
      // Predicated region
      $region9: #{tpu_custom_call.1} parent=5 // pred_check
        _
      $region10: #{tpu_custom_call.1} parent=5 // pred_check_branch
        %152 = sbr.rel (%p149) target = $region12
      $region11: #{tpu_custom_call.1} parent=5 // pred_region
        %s153 = ssub.s32 %s19, 1
        // Predicated region
        $region13: #{tpu_custom_call.1} parent=11 // pred_check
          %p154 = pneg %p92
        $region14: #{tpu_custom_call.1} parent=11 // pred_check_branch
          %156 = sbr.rel (%p154) target = $region16
        $region15: #{tpu_custom_call.1} parent=11 // pred_region
          _
        $region16: #{tpu_custom_call.1} parent=11 // pred_fallthru
          _
        // Predicated region
        $region17: #{tpu_custom_call.1} parent=11 // pred_check
          %p157 = pneg %p113
        $region18: #{tpu_custom_call.1} parent=11 // pred_check_branch
          %159 = sbr.rel (%p157) target = $region20
        $region19: #{tpu_custom_call.1} parent=11 // pred_region
          _
        $region20: #{tpu_custom_call.1} parent=11 // pred_fallthru
          _
      $region12: #{tpu_custom_call.1} parent=5 // pred_fallthru
        _
      %p160 = scmp.lt.s32.totalorder %s19, 4
      // Predicated region
      $region21: #{tpu_custom_call.1} parent=5 // pred_check
        %p161 = pneg %p160
      $region22: #{tpu_custom_call.1} parent=5 // pred_check_branch
        %163 = sbr.rel (%p161) target = $region24
      $region23: #{tpu_custom_call.1} parent=5 // pred_region
        // Predicated region
        $region25: #{tpu_custom_call.1} parent=23 // pred_check
          %p164 = pneg %p39
        $region26: #{tpu_custom_call.1} parent=23 // pred_check_branch
          %166 = sbr.rel (%p164) target = $region28
        $region27: #{tpu_custom_call.1} parent=23 // pred_region
          %s167 = sand.u32 %s29, 1
          %s168 = scalar_lea.sflag [#allocation3], %s167
          %s169 = sand.u32 %s29, 1
          %s170 = smul.addr %s169, 256
          %s171 = scalar_lea.vmem [#allocation2], %s170
          %s172 = smul.u32 8, %s19
          %s174 = ssub.s32 4096, 4096
          %175 = vsyncadd %s168, %s174
          %s176 = smul.addr %s172, 4
          %s177 = smul.addr %s176, 128
          %s178 = scalar_lea.hbm %s0, %s177
          %s179 = sshll.u32 %s171, 4
          %s180 = int_to_ptr.vmem [resolvable:$true] %s179
          %185 = dma.hbm_to_vmem [thread:$0]  %s178, 4096, %s180, %s168, 512, 512, 32
        $region28: #{tpu_custom_call.1} parent=23 // pred_fallthru
          _
        // Predicated region
        $region29: #{tpu_custom_call.1} parent=23 // pred_check
          %p186 = pneg %p65
        $region30: #{tpu_custom_call.1} parent=23 // pred_check_branch
          %188 = sbr.rel (%p186) target = $region32
        $region31: #{tpu_custom_call.1} parent=23 // pred_region
          %s189 = sand.u32 %s55, 1
          %s190 = scalar_lea.sflag [#allocation6], %s189
          %s191 = sand.u32 %s55, 1
          %s192 = smul.addr %s191, 256
          %s193 = scalar_lea.vmem [#allocation5], %s192
          %s194 = smul.u32 8, %s19
          %s196 = ssub.s32 4096, 4096
          %197 = vsyncadd %s190, %s196
          %s198 = smul.addr %s194, 4
          %s199 = smul.addr %s198, 128
          %s200 = scalar_lea.hbm %s1, %s199
          %s201 = sshll.u32 %s193, 4
          %s202 = int_to_ptr.vmem [resolvable:$true] %s201
          %207 = dma.hbm_to_vmem [thread:$0]  %s200, 4096, %s202, %s190, 512, 512, 32
        $region32: #{tpu_custom_call.1} parent=23 // pred_fallthru
          _
      $region24: #{tpu_custom_call.1} parent=5 // pred_fallthru
        _
      %p208 = scmp.le.s32.totalorder 1, %s19
      %p209 = scmp.lt.s32.totalorder %s19, 5
      %p210 = pnand %p208, %p209
      %p211 = pneg %p210
      // Predicated region
      $region33: #{tpu_custom_call.1} parent=5 // pred_check
        _
      $region34: #{tpu_custom_call.1} parent=5 // pred_check_branch
        %213 = sbr.rel (%p210) target = $region36
      $region35: #{tpu_custom_call.1} parent=5 // pred_region
        %s214 = ssub.s32 %s19, 1
        %s215 = sand.u32 %s32, 1
        %s216 = scalar_lea.sflag [#allocation3], %s215
        %s217 = sand.u32 %s32, 1
        %s218 = smul.addr %s217, 256
        %s219 = scalar_lea.vmem [#allocation2], %s218
        // Predicated region
        $region37: #{tpu_custom_call.1} parent=35 // pred_check
          %p220 = pneg %p45
        $region38: #{tpu_custom_call.1} parent=35 // pred_check_branch
          %222 = sbr.rel (%p220) target = $region40
        $region39: #{tpu_custom_call.1} parent=35 // pred_region
          %223 = dma.done %s216, 4096
        $region40: #{tpu_custom_call.1} parent=35 // pred_fallthru
          _
        %s224 = sand.u32 %s58, 1
        %s225 = scalar_lea.sflag [#allocation6], %s224
        %s226 = sand.u32 %s58, 1
        %s227 = smul.addr %s226, 256
        %s228 = scalar_lea.vmem [#allocation5], %s227
        // Predicated region
        $region41: #{tpu_custom_call.1} parent=35 // pred_check
          %p229 = pneg %p71
        $region42: #{tpu_custom_call.1} parent=35 // pred_check_branch
          %231 = sbr.rel (%p229) target = $region44
        $region43: #{tpu_custom_call.1} parent=35 // pred_region
          %232 = dma.done %s225, 4096
        $region44: #{tpu_custom_call.1} parent=35 // pred_fallthru
          _
        %s233 = sand.u32 %s32, 1
        %s234 = scalar_lea.sflag [#allocation3], %s233
        %s235 = sand.u32 %s32, 1
        %s236 = smul.addr %s235, 256
        %s237 = scalar_lea.vmem [#allocation2], %s236
        %p238 = pneg %p45
        %p239 = pneg %p42
        %s240 = sand.u32 %s58, 1
        %s241 = scalar_lea.sflag [#allocation6], %s240
        %s242 = sand.u32 %s58, 1
        %s243 = smul.addr %s242, 256
        %s244 = scalar_lea.vmem [#allocation5], %s243
        %p245 = pneg %p71
        %p246 = pneg %p68
        %p247 = pneg %p92
        %p248 = pneg %p89
        %p249 = pneg %p113
        %p250 = pneg %p110
        %p251 = pneg %p139
        %p252 = pneg %p136
        %s253 = sand.u32 %s126, 1
        %s254 = scalar_lea.sflag [#allocation4], %s253
        %s255 = sand.u32 %s126, 1
        %s256 = smul.addr %s255, 256
        %s257 = scalar_lea.vmem [#allocation7], %s256
        %s258 = smul.u32 8, %s24
        %s259 = smul.u32 8, %s24
        %s260 = smul.u32 8, %s24
        %v261 = vld [vmem:[%s219] sm:$0xff]
        %v262 = vld [vmem:[%s219 + $0x8] sm:$0xff]
        %v263 = vld [vmem:[%s219 + $0x10] sm:$0xff]
        %v264 = vld [vmem:[%s219 + $0x18] sm:$0xff]
        %v265 = vld [vmem:[%s219 + $0x20] sm:$0xff]
        %v266 = vld [vmem:[%s219 + $0x28] sm:$0xff]
        %v267 = vld [vmem:[%s219 + $0x30] sm:$0xff]
        %v268 = vld [vmem:[%s219 + $0x38] sm:$0xff]
        %v269 = vld [vmem:[%s219 + $0x40] sm:$0xff]
        %v270 = vld [vmem:[%s219 + $0x48] sm:$0xff]
        %v271 = vld [vmem:[%s219 + $0x50] sm:$0xff]
        %v272 = vld [vmem:[%s219 + $0x58] sm:$0xff]
        %v273 = vld [vmem:[%s219 + $0x60] sm:$0xff]
        %v274 = vld [vmem:[%s219 + $0x68] sm:$0xff]
        %v275 = vld [vmem:[%s219 + $0x70] sm:$0xff]
        %v276 = vld [vmem:[%s219 + $0x78] sm:$0xff]
        %v277 = vld [vmem:[%s219 + $0x80] sm:$0xff]
        %v278 = vld [vmem:[%s219 + $0x88] sm:$0xff]
        %v279 = vld [vmem:[%s219 + $0x90] sm:$0xff]
        %v280 = vld [vmem:[%s219 + $0x98] sm:$0xff]
        %v281 = vld [vmem:[%s219 + $0xa0] sm:$0xff]
        %v282 = vld [vmem:[%s219 + $0xa8] sm:$0xff]
        %v283 = vld [vmem:[%s219 + $0xb0] sm:$0xff]
        %v284 = vld [vmem:[%s219 + $0xb8] sm:$0xff]
        %v285 = vld [vmem:[%s219 + $0xc0] sm:$0xff]
        %v286 = vld [vmem:[%s219 + $0xc8] sm:$0xff]
        %v287 = vld [vmem:[%s219 + $0xd0] sm:$0xff]
        %v288 = vld [vmem:[%s219 + $0xd8] sm:$0xff]
        %v289 = vld [vmem:[%s219 + $0xe0] sm:$0xff]
        %v290 = vld [vmem:[%s219 + $0xe8] sm:$0xff]
        %v291 = vld [vmem:[%s219 + $0xf0] sm:$0xff]
        %v292 = vld [vmem:[%s219 + $0xf8] sm:$0xff]
        %v293 = vld [vmem:[%s228] sm:$0xff]
        %v294 = vld [vmem:[%s228 + $0x8] sm:$0xff]
        %v295 = vld [vmem:[%s228 + $0x10] sm:$0xff]
        %v296 = vld [vmem:[%s228 + $0x18] sm:$0xff]
        %v297 = vld [vmem:[%s228 + $0x20] sm:$0xff]
        %v298 = vld [vmem:[%s228 + $0x28] sm:$0xff]
        %v299 = vld [vmem:[%s228 + $0x30] sm:$0xff]
        %v300 = vld [vmem:[%s228 + $0x38] sm:$0xff]
        %v301 = vld [vmem:[%s228 + $0x40] sm:$0xff]
        %v302 = vld [vmem:[%s228 + $0x48] sm:$0xff]
        %v303 = vld [vmem:[%s228 + $0x50] sm:$0xff]
        %v304 = vld [vmem:[%s228 + $0x58] sm:$0xff]
        %v305 = vld [vmem:[%s228 + $0x60] sm:$0xff]
        %v306 = vld [vmem:[%s228 + $0x68] sm:$0xff]
        %v307 = vld [vmem:[%s228 + $0x70] sm:$0xff]
        %v308 = vld [vmem:[%s228 + $0x78] sm:$0xff]
        %v309 = vld [vmem:[%s228 + $0x80] sm:$0xff]
        %v310 = vld [vmem:[%s228 + $0x88] sm:$0xff]
        %v311 = vld [vmem:[%s228 + $0x90] sm:$0xff]
        %v312 = vld [vmem:[%s228 + $0x98] sm:$0xff]
        %v313 = vld [vmem:[%s228 + $0xa0] sm:$0xff]
        %v314 = vld [vmem:[%s228 + $0xa8] sm:$0xff]
        %v315 = vld [vmem:[%s228 + $0xb0] sm:$0xff]
        %v316 = vld [vmem:[%s228 + $0xb8] sm:$0xff]
        %v317 = vld [vmem:[%s228 + $0xc0] sm:$0xff]
        %v318 = vld [vmem:[%s228 + $0xc8] sm:$0xff]
        %v319 = vld [vmem:[%s228 + $0xd0] sm:$0xff]
        %v320 = vld [vmem:[%s228 + $0xd8] sm:$0xff]
        %v321 = vld [vmem:[%s228 + $0xe0] sm:$0xff]
        %v322 = vld [vmem:[%s228 + $0xe8] sm:$0xff]
        %v323 = vld [vmem:[%s228 + $0xf0] sm:$0xff]
        %v324 = vld [vmem:[%s228 + $0xf8] sm:$0xff]
        %v325 = vadd.f32 %v261, %v293
        %v326 = vadd.f32 %v262, %v294
        %v327 = vadd.f32 %v263, %v295
        %v328 = vadd.f32 %v264, %v296
        %v329 = vadd.f32 %v265, %v297
        %v330 = vadd.f32 %v266, %v298
        %v331 = vadd.f32 %v267, %v299
        %v332 = vadd.f32 %v268, %v300
        %v333 = vadd.f32 %v269, %v301
        %v334 = vadd.f32 %v270, %v302
        %v335 = vadd.f32 %v271, %v303
        %v336 = vadd.f32 %v272, %v304
        %v337 = vadd.f32 %v273, %v305
        %v338 = vadd.f32 %v274, %v306
        %v339 = vadd.f32 %v275, %v307
        %v340 = vadd.f32 %v276, %v308
        %v341 = vadd.f32 %v277, %v309
        %v342 = vadd.f32 %v278, %v310
        %v343 = vadd.f32 %v279, %v311
        %v344 = vadd.f32 %v280, %v312
        %v345 = vadd.f32 %v281, %v313
        %v346 = vadd.f32 %v282, %v314
        %v347 = vadd.f32 %v283, %v315
        %v348 = vadd.f32 %v284, %v316
        %v349 = vadd.f32 %v285, %v317
        %v350 = vadd.f32 %v286, %v318
        %v351 = vadd.f32 %v287, %v319
        %v352 = vadd.f32 %v288, %v320
        %v353 = vadd.f32 %v289, %v321
        %v354 = vadd.f32 %v290, %v322
        %v355 = vadd.f32 %v291, %v323
        %v356 = vadd.f32 %v292, %v324
        %v357 = vadd.f32 %v325, %v326
        %v358 = vadd.f32 %v357, %v327
        %v359 = vadd.f32 %v358, %v328
        %360 = vadd.xlane.f32.xlu0 %v359
        %v361 = vpop.xlane.xlu0 %360
        %v362 = vadd.f32 %v329, %v330
        %v363 = vadd.f32 %v362, %v331
        %v364 = vadd.f32 %v363, %v332
        %365 = vadd.xlane.f32.xlu0 %v364
        %v366 = vpop.xlane.xlu0 %365
        %v367 = vadd.f32 %v333, %v334
        %v368 = vadd.f32 %v367, %v335
        %v369 = vadd.f32 %v368, %v336
        %370 = vadd.xlane.f32.xlu0 %v369
        %v371 = vpop.xlane.xlu0 %370
        %v372 = vadd.f32 %v337, %v338
        %v373 = vadd.f32 %v372, %v339
        %v374 = vadd.f32 %v373, %v340
        %375 = vadd.xlane.f32.xlu0 %v374
        %v376 = vpop.xlane.xlu0 %375
        %v377 = vadd.f32 %v341, %v342
        %v378 = vadd.f32 %v377, %v343
        %v379 = vadd.f32 %v378, %v344
        %380 = vadd.xlane.f32.xlu0 %v379
        %v381 = vpop.xlane.xlu0 %380
        %v382 = vadd.f32 %v345, %v346
        %v383 = vadd.f32 %v382, %v347
        %v384 = vadd.f32 %v383, %v348
        %385 = vadd.xlane.f32.xlu0 %v384
        %v386 = vpop.xlane.xlu0 %385
        %v387 = vadd.f32 %v349, %v350
        %v388 = vadd.f32 %v387, %v351
        %v389 = vadd.f32 %v388, %v352
        %390 = vadd.xlane.f32.xlu0 %v389
        %v391 = vpop.xlane.xlu0 %390
        %v392 = vadd.f32 %v353, %v354
        %v393 = vadd.f32 %v392, %v355
        %v394 = vadd.f32 %v393, %v356
        %395 = vadd.xlane.f32.xlu0 %v394
        %v396 = vpop.xlane.xlu0 %395
        %v397 = vmul.f32 %v325, %v325
        %v398 = vmul.f32 %v326, %v326
        %v399 = vmul.f32 %v327, %v327
        %v400 = vmul.f32 %v328, %v328
        %v401 = vmul.f32 %v329, %v329
        %v402 = vmul.f32 %v330, %v330
        %v403 = vmul.f32 %v331, %v331
        %v404 = vmul.f32 %v332, %v332
        %v405 = vmul.f32 %v333, %v333
        %v406 = vmul.f32 %v334, %v334
        %v407 = vmul.f32 %v335, %v335
        %v408 = vmul.f32 %v336, %v336
        %v409 = vmul.f32 %v337, %v337
        %v410 = vmul.f32 %v338, %v338
        %v411 = vmul.f32 %v339, %v339
        %v412 = vmul.f32 %v340, %v340
        %v413 = vmul.f32 %v341, %v341
        %v414 = vmul.f32 %v342, %v342
        %v415 = vmul.f32 %v343, %v343
        %v416 = vmul.f32 %v344, %v344
        %v417 = vmul.f32 %v345, %v345
        %v418 = vmul.f32 %v346, %v346
        %v419 = vmul.f32 %v347, %v347
        %v420 = vmul.f32 %v348, %v348
        %v421 = vmul.f32 %v349, %v349
        %v422 = vmul.f32 %v350, %v350
        %v423 = vmul.f32 %v351, %v351
        %v424 = vmul.f32 %v352, %v352
        %v425 = vmul.f32 %v353, %v353
        %v426 = vmul.f32 %v354, %v354
        %v427 = vmul.f32 %v355, %v355
        %v428 = vmul.f32 %v356, %v356
        %v429 = vadd.f32 %v397, %v398
        %v430 = vadd.f32 %v429, %v399
        %v431 = vadd.f32 %v430, %v400
        %432 = vadd.xlane.f32.xlu0 %v431
        %v433 = vpop.xlane.xlu0 %432
        %v434 = vadd.f32 %v401, %v402
        %v435 = vadd.f32 %v434, %v403
        %v436 = vadd.f32 %v435, %v404
        %437 = vadd.xlane.f32.xlu0 %v436
        %v438 = vpop.xlane.xlu0 %437
        %v439 = vadd.f32 %v405, %v406
        %v440 = vadd.f32 %v439, %v407
        %v441 = vadd.f32 %v440, %v408
        %442 = vadd.xlane.f32.xlu0 %v441
        %v443 = vpop.xlane.xlu0 %442
        %v444 = vadd.f32 %v409, %v410
        %v445 = vadd.f32 %v444, %v411
        %v446 = vadd.f32 %v445, %v412
        %447 = vadd.xlane.f32.xlu0 %v446
        %v448 = vpop.xlane.xlu0 %447
        %v449 = vadd.f32 %v413, %v414
        %v450 = vadd.f32 %v449, %v415
        %v451 = vadd.f32 %v450, %v416
        %452 = vadd.xlane.f32.xlu0 %v451
        %v453 = vpop.xlane.xlu0 %452
        %v454 = vadd.f32 %v417, %v418
        %v455 = vadd.f32 %v454, %v419
        %v456 = vadd.f32 %v455, %v420
        %457 = vadd.xlane.f32.xlu0 %v456
        %v458 = vpop.xlane.xlu0 %457
        %v459 = vadd.f32 %v421, %v422
        %v460 = vadd.f32 %v459, %v423
        %v461 = vadd.f32 %v460, %v424
        %462 = vadd.xlane.f32.xlu0 %v461
        %v463 = vpop.xlane.xlu0 %462
        %v464 = vadd.f32 %v425, %v426
        %v465 = vadd.f32 %v464, %v427
        %v466 = vadd.f32 %v465, %v428
        %467 = vadd.xlane.f32.xlu0 %v466
        %v468 = vpop.xlane.xlu0 %467
        %v469 = vmul.f32 %v361, 0.001953125
        %v470 = vmul.f32 %v366, 0.001953125
        %v471 = vmul.f32 %v371, 0.001953125
        %v472 = vmul.f32 %v376, 0.001953125
        %v473 = vmul.f32 %v381, 0.001953125
        %v474 = vmul.f32 %v386, 0.001953125
        %v475 = vmul.f32 %v391, 0.001953125
        %v476 = vmul.f32 %v396, 0.001953125
        %v477 = vmul.f32 %v433, 0.001953125
        %v478 = vmul.f32 %v438, 0.001953125
        %v479 = vmul.f32 %v443, 0.001953125
        %v480 = vmul.f32 %v448, 0.001953125
        %v481 = vmul.f32 %v453, 0.001953125
        %v482 = vmul.f32 %v458, 0.001953125
        %v483 = vmul.f32 %v463, 0.001953125
        %v484 = vmul.f32 %v468, 0.001953125
        %v485 = vmul.f32 %v469, %v469
        %v486 = vmul.f32 %v470, %v470
        %v487 = vmul.f32 %v471, %v471
        %v488 = vmul.f32 %v472, %v472
        %v489 = vmul.f32 %v473, %v473
        %v490 = vmul.f32 %v474, %v474
        %v491 = vmul.f32 %v475, %v475
        %v492 = vmul.f32 %v476, %v476
        %v493 = vsub.f32 %v477, %v485
        %v494 = vsub.f32 %v478, %v486
        %v495 = vsub.f32 %v479, %v487
        %v496 = vsub.f32 %v480, %v488
        %v497 = vsub.f32 %v481, %v489
        %v498 = vsub.f32 %v482, %v490
        %v499 = vsub.f32 %v483, %v491
        %v500 = vsub.f32 %v484, %v492
        %v501 = vadd.f32 %v493, 1e-05
        %v502 = vadd.f32 %v494, 1e-05
        %v503 = vadd.f32 %v495, 1e-05
        %v504 = vadd.f32 %v496, 1e-05
        %v505 = vadd.f32 %v497, 1e-05
        %v506 = vadd.f32 %v498, 1e-05
        %v507 = vadd.f32 %v499, 1e-05
        %v508 = vadd.f32 %v500, 1e-05
        %v509 = vrsqrt.pop %v501
        %v510 = vrsqrt.pop %v502
        %v511 = vrsqrt.pop %v503
        %v512 = vrsqrt.pop %v504
        %v513 = vrsqrt.pop %v505
        %v514 = vrsqrt.pop %v506
        %v515 = vrsqrt.pop %v507
        %v516 = vrsqrt.pop %v508
        %v517 = vld [vmem:[%s2] sm:$0xf]
        %v518 = vld [vmem:[%s3] sm:$0xf]
        %v519 = vsub.f32 %v325, %v469
        %v520 = vsub.f32 %v326, %v469
        %v521 = vsub.f32 %v327, %v469
        %v522 = vsub.f32 %v328, %v469
        %v523 = vsub.f32 %v329, %v470
        %v524 = vsub.f32 %v330, %v470
        %v525 = vsub.f32 %v331, %v470
        %v526 = vsub.f32 %v332, %v470
        %v527 = vsub.f32 %v333, %v471
        %v528 = vsub.f32 %v334, %v471
        %v529 = vsub.f32 %v335, %v471
        %v530 = vsub.f32 %v336, %v471
        %v531 = vsub.f32 %v337, %v472
        %v532 = vsub.f32 %v338, %v472
        %v533 = vsub.f32 %v339, %v472
        %v534 = vsub.f32 %v340, %v472
        %v535 = vsub.f32 %v341, %v473
        %v536 = vsub.f32 %v342, %v473
        %v537 = vsub.f32 %v343, %v473
        %v538 = vsub.f32 %v344, %v473
        %v539 = vsub.f32 %v345, %v474
        %v540 = vsub.f32 %v346, %v474
        %v541 = vsub.f32 %v347, %v474
        %v542 = vsub.f32 %v348, %v474
        %v543 = vsub.f32 %v349, %v475
        %v544 = vsub.f32 %v350, %v475
        %v545 = vsub.f32 %v351, %v475
        %v546 = vsub.f32 %v352, %v475
        %v547 = vsub.f32 %v353, %v476
        %v548 = vsub.f32 %v354, %v476
        %v549 = vsub.f32 %v355, %v476
        %v550 = vsub.f32 %v356, %v476
        %v551 = vmul.f32 %v519, %v509
        %v552 = vmul.f32 %v520, %v509
        %v553 = vmul.f32 %v521, %v509
        %v554 = vmul.f32 %v522, %v509
        %v555 = vmul.f32 %v523, %v510
        %v556 = vmul.f32 %v524, %v510
        %v557 = vmul.f32 %v525, %v510
        %v558 = vmul.f32 %v526, %v510
        %v559 = vmul.f32 %v527, %v511
        %v560 = vmul.f32 %v528, %v511
        %v561 = vmul.f32 %v529, %v511
        %v562 = vmul.f32 %v530, %v511
        %v563 = vmul.f32 %v531, %v512
        %v564 = vmul.f32 %v532, %v512
        %v565 = vmul.f32 %v533, %v512
        %v566 = vmul.f32 %v534, %v512
        %v567 = vmul.f32 %v535, %v513
        %v568 = vmul.f32 %v536, %v513
        %v569 = vmul.f32 %v537, %v513
        %v570 = vmul.f32 %v538, %v513
        %v571 = vmul.f32 %v539, %v514
        %v572 = vmul.f32 %v540, %v514
        %v573 = vmul.f32 %v541, %v514
        %v574 = vmul.f32 %v542, %v514
        %v575 = vmul.f32 %v543, %v515
        %v576 = vmul.f32 %v544, %v515
        %v577 = vmul.f32 %v545, %v515
        %v578 = vmul.f32 %v546, %v515
        %v579 = vmul.f32 %v547, %v516
        %v580 = vmul.f32 %v548, %v516
        %v581 = vmul.f32 %v549, %v516
        %v582 = vmul.f32 %v550, %v516
        %v584 = vlaneseq
        %v585 = vshrl.u32 %v584, 7
        %v586 = vsub.s32 0, %v585
        %v587 = vrot.slane %v517, %v586
        %v588 = vlaneseq
        %v589 = vshrl.u32 %v588, 7
        %v590 = vsub.s32 1, %v589
        %v591 = vrot.slane %v517, %v590
        %v592 = vlaneseq
        %v593 = vshrl.u32 %v592, 7
        %v594 = vsub.s32 2, %v593
        %v595 = vrot.slane %v517, %v594
        %v596 = vlaneseq
        %v597 = vshrl.u32 %v596, 7
        %v598 = vsub.s32 3, %v597
        %v599 = vrot.slane %v517, %v598
        %v604 = vmul.f32 %v551, %v587
        %v605 = vmul.f32 %v552, %v591
        %v606 = vmul.f32 %v553, %v595
        %v607 = vmul.f32 %v554, %v599
        %v608 = vmul.f32 %v555, %v587
        %v609 = vmul.f32 %v556, %v591
        %v610 = vmul.f32 %v557, %v595
        %v611 = vmul.f32 %v558, %v599
        %v612 = vmul.f32 %v559, %v587
        %v613 = vmul.f32 %v560, %v591
        %v614 = vmul.f32 %v561, %v595
        %v615 = vmul.f32 %v562, %v599
        %v616 = vmul.f32 %v563, %v587
        %v617 = vmul.f32 %v564, %v591
        %v618 = vmul.f32 %v565, %v595
        %v619 = vmul.f32 %v566, %v599
        %v620 = vmul.f32 %v567, %v587
        %v621 = vmul.f32 %v568, %v591
        %v622 = vmul.f32 %v569, %v595
        %v623 = vmul.f32 %v570, %v599
        %v624 = vmul.f32 %v571, %v587
        %v625 = vmul.f32 %v572, %v591
        %v626 = vmul.f32 %v573, %v595
        %v627 = vmul.f32 %v574, %v599
        %v628 = vmul.f32 %v575, %v587
        %v629 = vmul.f32 %v576, %v591
        %v630 = vmul.f32 %v577, %v595
        %v631 = vmul.f32 %v578, %v599
        %v632 = vmul.f32 %v579, %v587
        %v633 = vmul.f32 %v580, %v591
        %v634 = vmul.f32 %v581, %v595
        %v635 = vmul.f32 %v582, %v599
        %v637 = vlaneseq
        %v638 = vshrl.u32 %v637, 7
        %v639 = vsub.s32 0, %v638
        %v640 = vrot.slane %v518, %v639
        %v641 = vlaneseq
        %v642 = vshrl.u32 %v641, 7
        %v643 = vsub.s32 1, %v642
        %v644 = vrot.slane %v518, %v643
        %v645 = vlaneseq
        %v646 = vshrl.u32 %v645, 7
        %v647 = vsub.s32 2, %v646
        %v648 = vrot.slane %v518, %v647
        %v649 = vlaneseq
        %v650 = vshrl.u32 %v649, 7
        %v651 = vsub.s32 3, %v650
        %v652 = vrot.slane %v518, %v651
        %v657 = vadd.f32 %v604, %v640
        %v658 = vadd.f32 %v605, %v644
        %v659 = vadd.f32 %v606, %v648
        %v660 = vadd.f32 %v607, %v652
        %v661 = vadd.f32 %v608, %v640
        %v662 = vadd.f32 %v609, %v644
        %v663 = vadd.f32 %v610, %v648
        %v664 = vadd.f32 %v611, %v652
        %v665 = vadd.f32 %v612, %v640
        %v666 = vadd.f32 %v613, %v644
        %v667 = vadd.f32 %v614, %v648
        %v668 = vadd.f32 %v615, %v652
        %v669 = vadd.f32 %v616, %v640
        %v670 = vadd.f32 %v617, %v644
        %v671 = vadd.f32 %v618, %v648
        %v672 = vadd.f32 %v619, %v652
        %v673 = vadd.f32 %v620, %v640
        %v674 = vadd.f32 %v621, %v644
        %v675 = vadd.f32 %v622, %v648
        %v676 = vadd.f32 %v623, %v652
        %v677 = vadd.f32 %v624, %v640
        %v678 = vadd.f32 %v625, %v644
        %v679 = vadd.f32 %v626, %v648
        %v680 = vadd.f32 %v627, %v652
        %v681 = vadd.f32 %v628, %v640
        %v682 = vadd.f32 %v629, %v644
        %v683 = vadd.f32 %v630, %v648
        %v684 = vadd.f32 %v631, %v652
        %v685 = vadd.f32 %v632, %v640
        %v686 = vadd.f32 %v633, %v644
        %v687 = vadd.f32 %v634, %v648
        %v688 = vadd.f32 %v635, %v652
        %689 = vst [vmem:[%s257] sm:$0xff] %v657
        %690 = vst [vmem:[%s257 + $0x8] sm:$0xff] %v658
        %691 = vst [vmem:[%s257 + $0x10] sm:$0xff] %v659
        %692 = vst [vmem:[%s257 + $0x18] sm:$0xff] %v660
        %693 = vst [vmem:[%s257 + $0x20] sm:$0xff] %v661
        %694 = vst [vmem:[%s257 + $0x28] sm:$0xff] %v662
        %695 = vst [vmem:[%s257 + $0x30] sm:$0xff] %v663
        %696 = vst [vmem:[%s257 + $0x38] sm:$0xff] %v664
        %697 = vst [vmem:[%s257 + $0x40] sm:$0xff] %v665
        %698 = vst [vmem:[%s257 + $0x48] sm:$0xff] %v666
        %699 = vst [vmem:[%s257 + $0x50] sm:$0xff] %v667
        %700 = vst [vmem:[%s257 + $0x58] sm:$0xff] %v668
        %701 = vst [vmem:[%s257 + $0x60] sm:$0xff] %v669
        %702 = vst [vmem:[%s257 + $0x68] sm:$0xff] %v670
        %703 = vst [vmem:[%s257 + $0x70] sm:$0xff] %v671
        %704 = vst [vmem:[%s257 + $0x78] sm:$0xff] %v672
        %705 = vst [vmem:[%s257 + $0x80] sm:$0xff] %v673
        %706 = vst [vmem:[%s257 + $0x88] sm:$0xff] %v674
        %707 = vst [vmem:[%s257 + $0x90] sm:$0xff] %v675
        %708 = vst [vmem:[%s257 + $0x98] sm:$0xff] %v676
        %709 = vst [vmem:[%s257 + $0xa0] sm:$0xff] %v677
        %710 = vst [vmem:[%s257 + $0xa8] sm:$0xff] %v678
        %711 = vst [vmem:[%s257 + $0xb0] sm:$0xff] %v679
        %712 = vst [vmem:[%s257 + $0xb8] sm:$0xff] %v680
        %713 = vst [vmem:[%s257 + $0xc0] sm:$0xff] %v681
        %714 = vst [vmem:[%s257 + $0xc8] sm:$0xff] %v682
        %715 = vst [vmem:[%s257 + $0xd0] sm:$0xff] %v683
        %716 = vst [vmem:[%s257 + $0xd8] sm:$0xff] %v684
        %717 = vst [vmem:[%s257 + $0xe0] sm:$0xff] %v685
        %718 = vst [vmem:[%s257 + $0xe8] sm:$0xff] %v686
        %719 = vst [vmem:[%s257 + $0xf0] sm:$0xff] %v687
        %720 = vst [vmem:[%s257 + $0xf8] sm:$0xff] %v688
        %s721 = sand.u32 %s126, 1
        %s722 = scalar_lea.sflag [#allocation4], %s721
        %s723 = sand.u32 %s126, 1
        %s724 = smul.addr %s723, 256
        %s725 = scalar_lea.vmem [#allocation7], %s724
        // Predicated region
        $region45: #{tpu_custom_call.1} parent=35 // pred_check
          %p726 = pneg %p136
        $region46: #{tpu_custom_call.1} parent=35 // pred_check_branch
          %728 = sbr.rel (%p726) target = $region48
        $region47: #{tpu_custom_call.1} parent=35 // pred_region
          %s729 = smul.u32 8, %s24
          %s731 = ssub.s32 4096, 4096
          %732 = vsyncadd %s722, %s731
          %s733 = smul.addr %s729, 4
          %s734 = smul.addr %s733, 128
          %s735 = scalar_lea.hbm %s4, %s734
          %s736 = sshll.u32 %s725, 4
          %s737 = int_to_ptr.vmem [resolvable:$true] %s736
          %742 = dma.vmem_to_hbm [thread:$0]  %s737, 4096, %s735, %s722, 512, 512, 32
        $region48: #{tpu_custom_call.1} parent=35 // pred_fallthru
          _
      $region36: #{tpu_custom_call.1} parent=5 // pred_fallthru
        _
      %p743 = scmp.le.s32.totalorder 2, %s19
      // Predicated region
      $region49: #{tpu_custom_call.1} parent=5 // pred_check
        %p744 = pneg %p743
      $region50: #{tpu_custom_call.1} parent=5 // pred_check_branch
        %746 = sbr.rel (%p744) target = $region52
      $region51: #{tpu_custom_call.1} parent=5 // pred_region
        %s747 = ssub.s32 %s19, 2
        // Predicated region
        $region53: #{tpu_custom_call.1} parent=51 // pred_check
          %p748 = pneg %p142
        $region54: #{tpu_custom_call.1} parent=51 // pred_check_branch
          %750 = sbr.rel (%p748) target = $region56
        $region55: #{tpu_custom_call.1} parent=51 // pred_region
          %s751 = sand.u32 %s127, 1
          %s752 = scalar_lea.sflag [#allocation4], %s751
          %s753 = sand.u32 %s127, 1
          %s754 = smul.addr %s753, 256
          %s755 = scalar_lea.vmem [#allocation7], %s754
          %756 = dma.done %s752, 4096
        $region56: #{tpu_custom_call.1} parent=51 // pred_fallthru
          _
      $region52: #{tpu_custom_call.1} parent=5 // pred_fallthru
        _
    $region6: #{tpu_custom_call.1} parent=1 // loop_footer
      %s23 = sadd.s32 1, %s19
    $region7: #{tpu_custom_call.1} parent=1 // loop_footer_branch
      %18 = sbr.rel target = $region3
    $region8: #{tpu_custom_call.1} parent=1 // loop_exit
      _
    %757 = vsyncpa [#allocation3], 1
    %s758 = scalar_lea.sflag [#allocation3], 1
    %759 = vsyncpa %s758, 1
    %760 = vsyncpa [#allocation6], 1
    %s761 = scalar_lea.sflag [#allocation6], 1
    %762 = vsyncpa %s761, 1
    %763 = vsyncpa [#allocation4], 1
    %s764 = scalar_lea.sflag [#allocation4], 1
    %765 = vsyncpa %s764, 1

</llo_original>
